<compile_context>
chip_gen: v6e
topology: v6e:2x2x1
jax: 0.10.0
libtpu: 0.0.40
codegen_flags: <defaults>
</compile_context>

<pallas_src>
import jax
import jax.numpy as jnp
from jax.experimental import pallas as pl
from jax.experimental.pallas import tpu as pltpu

HIDDEN = 128
SUBLANE = 8
MAX_TILE_B = 2048
VMEM_BUDGET_BYTES = 12 * 1024 * 1024   # safe under v5e's 16 MiB scoped-VMEM default


def _round_up(x, m):
    return (x + m - 1) // m * m


def mlp_kernel(x_ref, w1_ref, b1_ref, w2_ref, b2_ref, w3_ref, b3_ref, o_ref):
    """Fused 3-layer MLP on one batch tile. Matmul operands in w*_ref.dtype, f32 accumulate."""
    cd = w1_ref.dtype
    # Layer 1: Linear(in_dim, 128) + ReLU
    x = x_ref[...].astype(cd)
    h1 = jnp.dot(x, w1_ref[...], preferred_element_type=jnp.float32)
    h1 = jnp.maximum(h1 + b1_ref[...], 0.0)
    # Layer 2: Linear(128, 128) + ReLU
    h2 = jnp.dot(h1.astype(cd), w2_ref[...], preferred_element_type=jnp.float32)
    h2 = jnp.maximum(h2 + b2_ref[...], 0.0)
    # Layer 3: Linear(128, out_dim) -- narrow (masked) store of only the true out_dim lanes.
    out = jnp.dot(h2.astype(cd), w3_ref[...], preferred_element_type=jnp.float32)
    o_ref[...] = (out + b3_ref[...]).astype(o_ref.dtype)


def prepare_params(params, compute_dtype=jnp.bfloat16):
    """One-time preprocessing (hoisted out of the forward path): cast matmul weights to the
    MXU operand dtype; biases stay f32 (added to the f32 accumulator)."""
    w1, b1, w2, b2, w3, b3 = params
    return (w1.astype(compute_dtype), b1.astype(jnp.float32),
            w2.astype(compute_dtype), b2.astype(jnp.float32),
            w3.astype(compute_dtype), b3.astype(jnp.float32))


def _pick_tile_b(B, in_dim, out_dim, x_itemsize, w_itemsize):
    B8 = _round_up(B, SUBLANE)
    # Big tiles amortize per-grid-step overhead ...
    tile_b = min(B8, MAX_TILE_B)
    # ... but keep the grid >= 2 when possible so the "parallel" batch axis can shard
    # across v7x's two TensorCores.
    if B8 >= 2 * SUBLANE:
        tile_b = min(tile_b, _round_up((B8 + 1) // 2, SUBLANE))
    tile_b = max(SUBLANE, _round_up(tile_b, SUBLANE))

    weights_bytes = (in_dim * HIDDEN + HIDDEN * HIDDEN + HIDDEN * out_dim) * w_itemsize
    bias_bytes = (2 * HIDDEN + out_dim) * 4

    def footprint(tb):
        streamed = 2 * tb * in_dim * x_itemsize + 2 * tb * out_dim * x_itemsize  # dbl-buffered x/out
        resident = 2 * (weights_bytes + bias_bytes)      # constant-index operands still get 2 buffers
        interm = tb * HIDDEN * 4 * 2 + tb * out_dim * 4  # f32 h1, h2, out
        if w_itemsize != x_itemsize:
            interm += tb * (in_dim + 2 * HIDDEN) * w_itemsize  # bf16 casts of x, h1, h2
        return streamed + resident + interm

    while footprint(tile_b) > VMEM_BUDGET_BYTES and tile_b > SUBLANE:
        tile_b = max(SUBLANE, _round_up(tile_b // 2, SUBLANE))
    return tile_b


def network_forward(x, prepared_params, *, tile_b=None):
    """Fused MLP forward. x: [B, in_dim] (any float dtype). Returns [B, out_dim] in x.dtype."""
    w1, b1, w2, b2, w3, b3 = prepared_params
    B, in_dim = x.shape
    out_dim = w3.shape[1]

    x_itemsize = jnp.dtype(x.dtype).itemsize
    w_itemsize = jnp.dtype(w1.dtype).itemsize

    if tile_b is None:
        tile_b = _pick_tile_b(B, in_dim, out_dim, x_itemsize, w_itemsize)
    tile_b = max(SUBLANE, _round_up(int(tile_b), SUBLANE))

    # Pad the batch only when needed (common divisible path adds no extra XLA copies).
    B_pad = _round_up(B, tile_b)
    if B_pad != B:
        x = jnp.pad(x, ((0, B_pad - B), (0, 0)))
    grid = (B_pad // tile_b,)

    flops = 2 * B_pad * (in_dim * HIDDEN + HIDDEN * HIDDEN + HIDDEN * out_dim)
    bytes_accessed = (B_pad * in_dim * x_itemsize
                      + B_pad * out_dim * x_itemsize
                      + (in_dim * HIDDEN + HIDDEN * HIDDEN + HIDDEN * out_dim) * w_itemsize
                      + (2 * HIDDEN + out_dim) * 4)

    out = pl.pallas_call(
        mlp_kernel,
        out_shape=jax.ShapeDtypeStruct((B_pad, out_dim), x.dtype),
        grid_spec=pltpu.PrefetchScalarGridSpec(
            num_scalar_prefetch=0,
            grid=grid,
            in_specs=[
                pl.BlockSpec((tile_b, in_dim), lambda i: (i, 0)),   # x tile (streamed, pipelined)
                # Constant index_maps -> weights/biases stay resident in VMEM across steps.
                pl.BlockSpec((in_dim, HIDDEN), lambda i: (0, 0)),   # w1
                pl.BlockSpec((1, HIDDEN), lambda i: (0, 0)),        # b1 (f32)
                pl.BlockSpec((HIDDEN, HIDDEN), lambda i: (0, 0)),   # w2
                pl.BlockSpec((1, HIDDEN), lambda i: (0, 0)),        # b2 (f32)
                pl.BlockSpec((HIDDEN, out_dim), lambda i: (0, 0)),  # w3 (true out_dim, no lane pad)
                pl.BlockSpec((1, out_dim), lambda i: (0, 0)),       # b3 (f32)
            ],
            # Block last dim == full out_dim -> legal narrow block; only out_dim columns
            # are ever written back to HBM (no 128-lane padding, no wrapper slice).
            out_specs=pl.BlockSpec((tile_b, out_dim), lambda i: (i, 0)),
        ),
        compiler_params=pltpu.CompilerParams(
            dimension_semantics=("parallel",),   # batch axis shards across v7x's 2 TCs
        ),
        cost_estimate=pl.CostEstimate(
            flops=int(flops), transcendentals=0, bytes_accessed=int(bytes_accessed)),
    )(x, w1, b1, w2, b2, w3, b3)

    if B_pad != B:
        out = out[:B]
    return out


def init_params(key, in_dim, out_dim):
    """Deterministic init mimicking PyTorch Linear defaults (uniform +/- 1/sqrt(fan_in)).
    Weights stored [fan_in, fan_out] (transposed vs torch) so the kernel computes x @ W + b."""
    ks = jax.random.split(key, 6)

    def linear_init(kw, kb, fan_in, fan_out):
        bound = 1.0 / jnp.sqrt(fan_in)
        w = jax.random.uniform(kw, (fan_in, fan_out), jnp.float32, -bound, bound)
        b = jax.random.uniform(kb, (1, fan_out), jnp.float32, -bound, bound)
        return w, b

    w1, b1 = linear_init(ks[0], ks[1], in_dim, HIDDEN)
    w2, b2 = linear_init(ks[2], ks[3], HIDDEN, HIDDEN)
    w3, b3 = linear_init(ks[4], ks[5], HIDDEN, out_dim)
    return (w1, b1, w2, b2, w3, b3)


def network_forward_ref(x, params):
    w1, b1, w2, b2, w3, b3 = params
    h1 = jnp.maximum(x @ w1 + b1, 0.0)
    h2 = jnp.maximum(h1 @ w2 + b2, 0.0)
    return h2 @ w3 + b3


if __name__ == "__main__":
    key = jax.random.PRNGKey(0)
    k_params, k_x = jax.random.split(key)

    in_dim, out_dim = 16, 4   # small observation / action dims typical of the RL agent
    params = init_params(k_params, in_dim, out_dim)

    # One-time param preprocessing (hoisted out of the forward path).
    params_f32 = prepare_params(params, jnp.float32)
    params_bf16 = prepare_params(params)              # default: bf16 MXU operands

    B = 256
    x = jax.random.normal(k_x, (B, in_dim), dtype=jnp.float32)
    ref = network_forward_ref(x, params)

    # 1) f32 operands: exact-ish match.
    out_f32 = jax.block_until_ready(network_forward(x, params_f32))
    assert out_f32.shape == (B, out_dim), out_f32.shape
    assert jnp.allclose(out_f32, ref, atol=1e-5, rtol=1e-5), "f32 mismatch vs reference"

    # 2) bf16 operands (default fast path on v5e/v6e/v7x), f32 accumulate -> relaxed tol.
    out_bf16 = jax.block_until_ready(network_forward(x, params_bf16))
    assert out_bf16.shape == (B, out_dim), out_bf16.shape
    assert jnp.allclose(out_bf16, ref, atol=5e-2, rtol=5e-2), "bf16 mismatch vs reference"

    # 3) Tiny / ragged batches still work (padded to a tile only when needed, sliced back).
    for B_small in (8, 100):
        xs = jax.random.normal(jax.random.PRNGKey(B_small), (B_small, in_dim),
                               dtype=jnp.float32)
        outs = jax.block_until_ready(network_forward(xs, params_f32))
        refs = network_forward_ref(xs, params)
        assert outs.shape == (B_small, out_dim), outs.shape
        assert jnp.allclose(outs, refs, atol=1e-5, rtol=1e-5), "small-batch mismatch"

    # 4) Explicit tile override path.
    out_t = jax.block_until_ready(network_forward(x, params_f32, tile_b=64))
    assert jnp.allclose(out_t, ref, atol=1e-5, rtol=1e-5), "tile override mismatch"

    print("KERNEL_OK")
</pallas_src>

<mosaic_0001>
module attributes {stable_mosaic.version = 11 : i64} {
  func.func @mlp_kernel(%arg0: i32, %arg1: memref<128x16xf32, #tpu.memory_space<vmem>>, %arg2: memref<16x128xf32, #tpu.memory_space<vmem>>, %arg3: memref<1x128xf32, #tpu.memory_space<vmem>>, %arg4: memref<128x128xf32, #tpu.memory_space<vmem>>, %arg5: memref<1x128xf32, #tpu.memory_space<vmem>>, %arg6: memref<128x4xf32, #tpu.memory_space<vmem>>, %arg7: memref<1x4xf32, #tpu.memory_space<vmem>>, %arg8: memref<128x4xf32, #tpu.memory_space<vmem>>) attributes {dimension_semantics = [#tpu.dimension_semantics<parallel>], iteration_bounds = array<i64: 2>, scalar_prefetch = 0 : i64, scratch_operands = 0 : i64, tpu.core_type = #tpu.core_type<tc>, window_params = [{transform_indices = @transform_0, window_bounds = array<i64: 128, 16>}, {pipeline_mode = #tpu.pipeline_mode<synchronous>, transform_indices = @transform_1, window_bounds = array<i64: 16, 128>}, {pipeline_mode = #tpu.pipeline_mode<synchronous>, transform_indices = @transform_2, window_bounds = array<i64: 1, 128>}, {pipeline_mode = #tpu.pipeline_mode<synchronous>, transform_indices = @transform_3, window_bounds = array<i64: 128, 128>}, {pipeline_mode = #tpu.pipeline_mode<synchronous>, transform_indices = @transform_4, window_bounds = array<i64: 1, 128>}, {pipeline_mode = #tpu.pipeline_mode<synchronous>, transform_indices = @transform_5, window_bounds = array<i64: 128, 4>}, {pipeline_mode = #tpu.pipeline_mode<synchronous>, transform_indices = @transform_6, window_bounds = array<i64: 1, 4>}, {transform_indices = @transform_7, window_bounds = array<i64: 128, 4>}]} {
    %c0 = arith.constant 0 : index
    %c0_0 = arith.constant 0 : index
    %0 = vector.load %arg1[%c0, %c0_0] : memref<128x16xf32, #tpu.memory_space<vmem>>, vector<128x16xf32>
    %c0_1 = arith.constant 0 : index
    %c0_2 = arith.constant 0 : index
    %1 = vector.load %arg2[%c0_1, %c0_2] : memref<16x128xf32, #tpu.memory_space<vmem>>, vector<16x128xf32>
    %cst = arith.constant dense<0.000000e+00> : vector<128x128xf32>
    %2 = tpu.matmul %0, %1, %cst {dimension_numbers = #tpu.dot_dimension_numbers<[1], [0], [0], [1], [0, 0, 1, 1], [], []>} : vector<128x16xf32>, vector<16x128xf32>, vector<128x128xf32> -> vector<128x128xf32>
    %c0_3 = arith.constant 0 : index
    %c0_4 = arith.constant 0 : index
    %3 = vector.load %arg3[%c0_3, %c0_4] : memref<1x128xf32, #tpu.memory_space<vmem>>, vector<1x128xf32>
    %4 = vector.broadcast %3 : vector<1x128xf32> to vector<128x128xf32>
    %5 = arith.addf %2, %4 : vector<128x128xf32>
    %cst_5 = arith.constant 0.000000e+00 : f32
    %6 = vector.broadcast %cst_5 : f32 to vector<128x128xf32>
    %7 = arith.maximumf %5, %6 : vector<128x128xf32>
    %c0_6 = arith.constant 0 : index
    %c0_7 = arith.constant 0 : index
    %8 = vector.load %arg4[%c0_6, %c0_7] : memref<128x128xf32, #tpu.memory_space<vmem>>, vector<128x128xf32>
    %cst_8 = arith.constant dense<0.000000e+00> : vector<128x128xf32>
    %9 = tpu.matmul %7, %8, %cst_8 {dimension_numbers = #tpu.dot_dimension_numbers<[1], [0], [0], [1], [0, 0, 1, 1], [], []>} : vector<128x128xf32>, vector<128x128xf32>, vector<128x128xf32> -> vector<128x128xf32>
    %c0_9 = arith.constant 0 : index
    %c0_10 = arith.constant 0 : index
    %10 = vector.load %arg5[%c0_9, %c0_10] : memref<1x128xf32, #tpu.memory_space<vmem>>, vector<1x128xf32>
    %11 = vector.broadcast %10 : vector<1x128xf32> to vector<128x128xf32>
    %12 = arith.addf %9, %11 : vector<128x128xf32>
    %cst_11 = arith.constant 0.000000e+00 : f32
    %13 = vector.broadcast %cst_11 : f32 to vector<128x128xf32>
    %14 = arith.maximumf %12, %13 : vector<128x128xf32>
    %c0_12 = arith.constant 0 : index
    %c0_13 = arith.constant 0 : index
    %15 = vector.load %arg6[%c0_12, %c0_13] : memref<128x4xf32, #tpu.memory_space<vmem>>, vector<128x4xf32>
    %cst_14 = arith.constant dense<0.000000e+00> : vector<128x4xf32>
    %16 = tpu.matmul %14, %15, %cst_14 {dimension_numbers = #tpu.dot_dimension_numbers<[1], [0], [0], [1], [0, 0, 1, 1], [], []>} : vector<128x128xf32>, vector<128x4xf32>, vector<128x4xf32> -> vector<128x4xf32>
    %c0_15 = arith.constant 0 : index
    %c0_16 = arith.constant 0 : index
    %17 = vector.load %arg7[%c0_15, %c0_16] : memref<1x4xf32, #tpu.memory_space<vmem>>, vector<1x4xf32>
    %18 = vector.broadcast %17 : vector<1x4xf32> to vector<128x4xf32>
    %19 = arith.addf %16, %18 : vector<128x4xf32>
    %c0_17 = arith.constant 0 : index
    %c0_18 = arith.constant 0 : index
    %20 = vector.load %arg8[%c0_17, %c0_18] : memref<128x4xf32, #tpu.memory_space<vmem>>, vector<128x4xf32>
    tpu.vector_store %arg8[%c0_17, %c0_18], %19 {strides = array<i32>} : memref<128x4xf32, #tpu.memory_space<vmem>>, vector<128x4xf32>,
    return
  }
  func.func @transform_0(%arg0: i32) -> (i32, i32) {
    %c0_i32 = arith.constant 0 : i32
    %c0_i32_0 = arith.constant 0 : i32
    return %arg0, %c0_i32 : i32, i32
  }
  func.func @transform_1(%arg0: i32) -> (i32, i32) {
    %c0_i32 = arith.constant 0 : i32
    %c0_i32_0 = arith.constant 0 : i32
    %c0_i32_1 = arith.constant 0 : i32
    return %c0_i32, %c0_i32_0 : i32, i32
  }
  func.func @transform_2(%arg0: i32) -> (i32, i32) {
    %c0_i32 = arith.constant 0 : i32
    %c0_i32_0 = arith.constant 0 : i32
    %c0_i32_1 = arith.constant 0 : i32
    return %c0_i32, %c0_i32_0 : i32, i32
  }
  func.func @transform_3(%arg0: i32) -> (i32, i32) {
    %c0_i32 = arith.constant 0 : i32
    %c0_i32_0 = arith.constant 0 : i32
    %c0_i32_1 = arith.constant 0 : i32
    return %c0_i32, %c0_i32_0 : i32, i32
  }
  func.func @transform_4(%arg0: i32) -> (i32, i32) {
    %c0_i32 = arith.constant 0 : i32
    %c0_i32_0 = arith.constant 0 : i32
    %c0_i32_1 = arith.constant 0 : i32
    return %c0_i32, %c0_i32_0 : i32, i32
  }
  func.func @transform_5(%arg0: i32) -> (i32, i32) {
    %c0_i32 = arith.constant 0 : i32
    %c0_i32_0 = arith.constant 0 : i32
    %c0_i32_1 = arith.constant 0 : i32
    return %c0_i32, %c0_i32_0 : i32, i32
  }
  func.func @transform_6(%arg0: i32) -> (i32, i32) {
    %c0_i32 = arith.constant 0 : i32
    %c0_i32_0 = arith.constant 0 : i32
    %c0_i32_1 = arith.constant 0 : i32
    return %c0_i32, %c0_i32_0 : i32, i32
  }
  func.func @transform_7(%arg0: i32) -> (i32, i32) {
    %c0_i32 = arith.constant 0 : i32
    %c0_i32_0 = arith.constant 0 : i32
    return %arg0, %c0_i32 : i32, i32
  }
}

</mosaic_0001>

<llo_original>
// kernel: tpu_custom_call.1
$region0: #{tpu_custom_call.1}
  #allocation0 [shape = 'u32[]', space=smem, size = 0x4, offset = 0x4, fixed_abs, tag = 'smem constant byte address 0x4 - core index']
  #allocation1 [shape = 'u32[144,128]{1,0:T(1,128)}', space=vmem, size = 0x12000, scoped, tag = 'internal scratch']
  %s0 = inlined_call_operand.vmem [shape: f32[256,16], index: 0, kind: input, shape index: {}]
  %s1 = inlined_call_operand.vmem [shape: f32[16,128], index: 1, kind: input, shape index: {}]
  %s2 = inlined_call_operand.vmem [shape: f32[1,128], index: 2, kind: input, shape index: {}]
  %s3 = inlined_call_operand.vmem [shape: f32[128,128], index: 3, kind: input, shape index: {}]
  %s4 = inlined_call_operand.vmem [shape: f32[1,128], index: 4, kind: input, shape index: {}]
  %s5 = inlined_call_operand.vmem [shape: f32[128,4], index: 5, kind: input, shape index: {}]
  %s6 = inlined_call_operand.vmem [shape: f32[1,4], index: 6, kind: input, shape index: {}]
  %s7 = inlined_call_operand.vmem [shape: f32[256,4], index: 7, kind: output, shape index: {}]
  %s8 = sld [smem:[#allocation0]]
  $region61: #{tpu_custom_call.1} parent=0
    _
  %s10 = ssub.s32 1, %s8
  %s11 = scalar_select 0, %s10, %s8
  loop: start=0, step=1, limit=4
  $region2: #{tpu_custom_call.1} parent=0 // loop_pre_header
    _
  $region3: #{tpu_custom_call.1} parent=0 // loop_header
    %s13 = sphi 0, %s17
    %p14 = scmp.ge.s32.totalorder %s13, 4
    %s23 = sphi 0, %s25
    %s26 = sphi 0, %s23
    %s27 = sphi 0, %s26
    %s43 = sphi 0, %s27
    %s47 = sphi 0, %s47
    %s49 = sphi 0, %s47
    %s50 = sphi 0, %s49
    %s64 = sphi 0, %s50
    %s68 = sphi 0, %s68
    %s70 = sphi 0, %s68
    %s71 = sphi 0, %s70
    %s85 = sphi 0, %s71
    %s89 = sphi 0, %s89
    %s91 = sphi 0, %s89
    %s92 = sphi 0, %s91
    %s106 = sphi 0, %s92
    %s110 = sphi 0, %s110
    %s112 = sphi 0, %s110
    %s113 = sphi 0, %s112
    %s127 = sphi 0, %s113
    %s131 = sphi 0, %s131
    %s133 = sphi 0, %s131
    %s134 = sphi 0, %s133
    %s148 = sphi 0, %s134
    %s152 = sphi 0, %s152
    %s154 = sphi 0, %s152
    %s155 = sphi 0, %s154
    %s169 = sphi 0, %s155
    %s175 = sphi 0, %s177
    %s178 = sphi 0, %s175
    %s179 = sphi 0, %s178
    %s195 = sphi 0, %s179
  $region4: #{tpu_custom_call.1} parent=0 // loop_header_branch
    %16 = sbr.rel (%p14) target = $region8
  $region5: #{tpu_custom_call.1} parent=0 // loop_body
    %s18 = ssub.s32 %s13, 1
    %s19 = ssub.s32 %s13, 2
    %s20 = sadd.s32 %s13, 1
    %s21 = ssub.s32 %s13, %s20
    %p22 = scmp.eq.s32.totalorder %s21, 0
    %s24 = sadd.s32 %s23, 1
    %s25 = scalar_select %p22, %s23, %s24
    %p28 = pneg %p22
    %p29 = scmp.eq.s32.totalorder %s13, 1
    %p30 = por %p28, %p29
    %p31 = scmp.ne.s32.totalorder %s23, %s26
    %p32 = scmp.eq.s32.totalorder %s13, 0
    %p33 = por %p31, %p32
    %p34 = scmp.ne.s32.totalorder %s23, %s26
    %p35 = scmp.eq.s32.totalorder %s18, 1
    %p36 = por %p34, %p35
    %p37 = scmp.ne.s32.totalorder %s26, %s27
    %p38 = scmp.eq.s32.totalorder %s18, 0
    %p39 = por %p37, %p38
    %p40 = scmp.ne.s32.totalorder %s26, %s27
    %p41 = scmp.eq.s32.totalorder %s19, 1
    %p42 = por %p40, %p41
    %p44 = scmp.ne.s32.totalorder %s27, %s43
    %p45 = scmp.eq.s32.totalorder %s19, 0
    %p46 = por %p44, %p45
    %s48 = sadd.s32 %s47, 1
    %p51 = scmp.eq.s32.totalorder %s13, 1
    %p52 = scmp.ne.s32.totalorder %s47, %s49
    %p53 = scmp.eq.s32.totalorder %s13, 0
    %p54 = por %p52, %p53
    %p55 = scmp.ne.s32.totalorder %s47, %s49
    %p56 = scmp.eq.s32.totalorder %s18, 1
    %p57 = por %p55, %p56
    %p58 = scmp.ne.s32.totalorder %s49, %s50
    %p59 = scmp.eq.s32.totalorder %s18, 0
    %p60 = por %p58, %p59
    %p61 = scmp.ne.s32.totalorder %s49, %s50
    %p62 = scmp.eq.s32.totalorder %s19, 1
    %p63 = por %p61, %p62
    %p65 = scmp.ne.s32.totalorder %s50, %s64
    %p66 = scmp.eq.s32.totalorder %s19, 0
    %p67 = por %p65, %p66
    %s69 = sadd.s32 %s68, 1
    %p72 = scmp.eq.s32.totalorder %s13, 1
    %p73 = scmp.ne.s32.totalorder %s68, %s70
    %p74 = scmp.eq.s32.totalorder %s13, 0
    %p75 = por %p73, %p74
    %p76 = scmp.ne.s32.totalorder %s68, %s70
    %p77 = scmp.eq.s32.totalorder %s18, 1
    %p78 = por %p76, %p77
    %p79 = scmp.ne.s32.totalorder %s70, %s71
    %p80 = scmp.eq.s32.totalorder %s18, 0
    %p81 = por %p79, %p80
    %p82 = scmp.ne.s32.totalorder %s70, %s71
    %p83 = scmp.eq.s32.totalorder %s19, 1
    %p84 = por %p82, %p83
    %p86 = scmp.ne.s32.totalorder %s71, %s85
    %p87 = scmp.eq.s32.totalorder %s19, 0
    %p88 = por %p86, %p87
    %s90 = sadd.s32 %s89, 1
    %p93 = scmp.eq.s32.totalorder %s13, 1
    %p94 = scmp.ne.s32.totalorder %s89, %s91
    %p95 = scmp.eq.s32.totalorder %s13, 0
    %p96 = por %p94, %p95
    %p97 = scmp.ne.s32.totalorder %s89, %s91
    %p98 = scmp.eq.s32.totalorder %s18, 1
    %p99 = por %p97, %p98
    %p100 = scmp.ne.s32.totalorder %s91, %s92
    %p101 = scmp.eq.s32.totalorder %s18, 0
    %p102 = por %p100, %p101
    %p103 = scmp.ne.s32.totalorder %s91, %s92
    %p104 = scmp.eq.s32.totalorder %s19, 1
    %p105 = por %p103, %p104
    %p107 = scmp.ne.s32.totalorder %s92, %s106
    %p108 = scmp.eq.s32.totalorder %s19, 0
    %p109 = por %p107, %p108
    %s111 = sadd.s32 %s110, 1
    %p114 = scmp.eq.s32.totalorder %s13, 1
    %p115 = scmp.ne.s32.totalorder %s110, %s112
    %p116 = scmp.eq.s32.totalorder %s13, 0
    %p117 = por %p115, %p116
    %p118 = scmp.ne.s32.totalorder %s110, %s112
    %p119 = scmp.eq.s32.totalorder %s18, 1
    %p120 = por %p118, %p119
    %p121 = scmp.ne.s32.totalorder %s112, %s113
    %p122 = scmp.eq.s32.totalorder %s18, 0
    %p123 = por %p121, %p122
    %p124 = scmp.ne.s32.totalorder %s112, %s113
    %p125 = scmp.eq.s32.totalorder %s19, 1
    %p126 = por %p124, %p125
    %p128 = scmp.ne.s32.totalorder %s113, %s127
    %p129 = scmp.eq.s32.totalorder %s19, 0
    %p130 = por %p128, %p129
    %s132 = sadd.s32 %s131, 1
    %p135 = scmp.eq.s32.totalorder %s13, 1
    %p136 = scmp.ne.s32.totalorder %s131, %s133
    %p137 = scmp.eq.s32.totalorder %s13, 0
    %p138 = por %p136, %p137
    %p139 = scmp.ne.s32.totalorder %s131, %s133
    %p140 = scmp.eq.s32.totalorder %s18, 1
    %p141 = por %p139, %p140
    %p142 = scmp.ne.s32.totalorder %s133, %s134
    %p143 = scmp.eq.s32.totalorder %s18, 0
    %p144 = por %p142, %p143
    %p145 = scmp.ne.s32.totalorder %s133, %s134
    %p146 = scmp.eq.s32.totalorder %s19, 1
    %p147 = por %p145, %p146
    %p149 = scmp.ne.s32.totalorder %s134, %s148
    %p150 = scmp.eq.s32.totalorder %s19, 0
    %p151 = por %p149, %p150
    %s153 = sadd.s32 %s152, 1
    %p156 = scmp.eq.s32.totalorder %s13, 1
    %p157 = scmp.ne.s32.totalorder %s152, %s154
    %p158 = scmp.eq.s32.totalorder %s13, 0
    %p159 = por %p157, %p158
    %p160 = scmp.ne.s32.totalorder %s152, %s154
    %p161 = scmp.eq.s32.totalorder %s18, 1
    %p162 = por %p160, %p161
    %p163 = scmp.ne.s32.totalorder %s154, %s155
    %p164 = scmp.eq.s32.totalorder %s18, 0
    %p165 = por %p163, %p164
    %p166 = scmp.ne.s32.totalorder %s154, %s155
    %p167 = scmp.eq.s32.totalorder %s19, 1
    %p168 = por %p166, %p167
    %p170 = scmp.ne.s32.totalorder %s155, %s169
    %p171 = scmp.eq.s32.totalorder %s19, 0
    %p172 = por %p170, %p171
    %s173 = ssub.s32 %s13, %s20
    %p174 = scmp.eq.s32.totalorder %s173, 0
    %s176 = sadd.s32 %s175, 1
    %s177 = scalar_select %p174, %s175, %s176
    %p180 = pneg %p174
    %p181 = scmp.eq.s32.totalorder %s13, 1
    %p182 = por %p180, %p181
    %p183 = scmp.ne.s32.totalorder %s175, %s178
    %p184 = scmp.eq.s32.totalorder %s13, 0
    %p185 = por %p183, %p184
    %p186 = scmp.ne.s32.totalorder %s175, %s178
    %p187 = scmp.eq.s32.totalorder %s18, 1
    %p188 = por %p186, %p187
    %p189 = scmp.ne.s32.totalorder %s178, %s179
    %p190 = scmp.eq.s32.totalorder %s18, 0
    %p191 = por %p189, %p190
    %p192 = scmp.ne.s32.totalorder %s178, %s179
    %p193 = scmp.eq.s32.totalorder %s19, 1
    %p194 = por %p192, %p193
    %p196 = scmp.ne.s32.totalorder %s179, %s195
    %p197 = scmp.eq.s32.totalorder %s19, 0
    %p198 = por %p196, %p197
    %p199 = scmp.le.s32.totalorder 1, %s13
    %p200 = scmp.lt.s32.totalorder %s13, 3
    %p201 = pnand %p199, %p200
    %p202 = pneg %p201
    // Predicated region
    $region9: #{tpu_custom_call.1} parent=5 // pred_check
      _
    $region10: #{tpu_custom_call.1} parent=5 // pred_check_branch
      %204 = sbr.rel (%p201) target = $region12
    $region11: #{tpu_custom_call.1} parent=5 // pred_region
      %s205 = ssub.s32 %s13, 1
      // Predicated region
      $region13: #{tpu_custom_call.1} parent=11 // pred_check
        %p206 = pneg %p60
      $region14: #{tpu_custom_call.1} parent=11 // pred_check_branch
        %208 = sbr.rel (%p206) target = $region16
      $region15: #{tpu_custom_call.1} parent=11 // pred_region
        _
      $region16: #{tpu_custom_call.1} parent=11 // pred_fallthru
        _
      // Predicated region
      $region17: #{tpu_custom_call.1} parent=11 // pred_check
        %p209 = pneg %p81
      $region18: #{tpu_custom_call.1} parent=11 // pred_check_branch
        %211 = sbr.rel (%p209) target = $region20
      $region19: #{tpu_custom_call.1} parent=11 // pred_region
        _
      $region20: #{tpu_custom_call.1} parent=11 // pred_fallthru
        _
      // Predicated region
      $region21: #{tpu_custom_call.1} parent=11 // pred_check
        %p212 = pneg %p102
      $region22: #{tpu_custom_call.1} parent=11 // pred_check_branch
        %214 = sbr.rel (%p212) target = $region24
      $region23: #{tpu_custom_call.1} parent=11 // pred_region
        _
      $region24: #{tpu_custom_call.1} parent=11 // pred_fallthru
        _
      // Predicated region
      $region25: #{tpu_custom_call.1} parent=11 // pred_check
        %p215 = pneg %p123
      $region26: #{tpu_custom_call.1} parent=11 // pred_check_branch
        %217 = sbr.rel (%p215) target = $region28
      $region27: #{tpu_custom_call.1} parent=11 // pred_region
        _
      $region28: #{tpu_custom_call.1} parent=11 // pred_fallthru
        _
      // Predicated region
      $region29: #{tpu_custom_call.1} parent=11 // pred_check
        %p218 = pneg %p144
      $region30: #{tpu_custom_call.1} parent=11 // pred_check_branch
        %220 = sbr.rel (%p218) target = $region32
      $region31: #{tpu_custom_call.1} parent=11 // pred_region
        _
      $region32: #{tpu_custom_call.1} parent=11 // pred_fallthru
        _
      // Predicated region
      $region33: #{tpu_custom_call.1} parent=11 // pred_check
        %p221 = pneg %p165
      $region34: #{tpu_custom_call.1} parent=11 // pred_check_branch
        %223 = sbr.rel (%p221) target = $region36
      $region35: #{tpu_custom_call.1} parent=11 // pred_region
        _
      $region36: #{tpu_custom_call.1} parent=11 // pred_fallthru
        _
    $region12: #{tpu_custom_call.1} parent=5 // pred_fallthru
      _
    %p224 = scmp.lt.s32.totalorder %s13, 2
    // Predicated region
    $region37: #{tpu_custom_call.1} parent=5 // pred_check
      %p225 = pneg %p224
    $region38: #{tpu_custom_call.1} parent=5 // pred_check_branch
      %227 = sbr.rel (%p225) target = $region40
    $region39: #{tpu_custom_call.1} parent=5 // pred_region
      // Predicated region
      $region41: #{tpu_custom_call.1} parent=39 // pred_check
        %p228 = pneg %p33
      $region42: #{tpu_custom_call.1} parent=39 // pred_check_branch
        %230 = sbr.rel (%p228) target = $region44
      $region43: #{tpu_custom_call.1} parent=39 // pred_region
        %s231 = smul.u32 16, %s13
        %p232 = scmp.lt.s32.totalorder %s231, 31
        %s233 = scalar_select %p232, %s231, 31
        %s234 = smul.addr %s233, 8
        %s235 = scalar_lea.vmem %s0, %s234
        %s236 = smul.u32 16, %s13
      $region44: #{tpu_custom_call.1} parent=39 // pred_fallthru
        _
    $region40: #{tpu_custom_call.1} parent=5 // pred_fallthru
      _
    %p237 = scmp.le.s32.totalorder 1, %s13
    %p238 = scmp.lt.s32.totalorder %s13, 3
    %p239 = pnand %p237, %p238
    %p240 = pneg %p239
    // Predicated region
    $region45: #{tpu_custom_call.1} parent=5 // pred_check
      _
    $region46: #{tpu_custom_call.1} parent=5 // pred_check_branch
      %242 = sbr.rel (%p239) target = $region48
    $region47: #{tpu_custom_call.1} parent=5 // pred_region
      %s243 = ssub.s32 %s13, 1
      %s244 = smul.u32 16, %s18
      %p245 = scmp.lt.s32.totalorder %s244, 31
      %s246 = scalar_select %p245, %s244, 31
      %s247 = smul.addr %s246, 8
      %s248 = scalar_lea.vmem %s0, %s247
      %p249 = pneg %p39
      %p250 = pneg %p36
      %p251 = pneg %p60
      %p252 = pneg %p57
      %p253 = pneg %p81
      %p254 = pneg %p78
      %p255 = pneg %p102
      %p256 = pneg %p99
      %p257 = pneg %p123
      %p258 = pneg %p120
      %p259 = pneg %p144
      %p260 = pneg %p141
      %p261 = pneg %p165
      %p262 = pneg %p162
      %p263 = pneg %p191
      %p264 = pneg %p188
      %s265 = smul.u32 16, %s18
      %p266 = scmp.lt.s32.totalorder %s265, 31
      %s267 = scalar_select %p266, %s265, 31
      %s268 = smul.addr %s267, 8
      %s269 = scalar_lea.vmem %s7, %s268
      %s270 = smul.u32 16, %s18
      %p271 = scmp.lt.s32.totalorder %s270, 31
      %s272 = scalar_select %p271, %s270, 31
      %s273 = smul.addr %s272, 8
      %s274 = scalar_lea.vmem %s0, %s273
      %s275 = smul.u32 16, %s18
      %s276 = smul.u32 16, %s18
      %p277 = scmp.lt.s32.totalorder %s276, 31
      %s278 = scalar_select %p277, %s276, 31
      %s279 = smul.addr %s278, 8
      %s280 = scalar_lea.vmem %s7, %s279
      %s281 = smul.u32 16, %s18
      %v282 = vld [vmem:[%s274] sm:$0xff]
      %v283 = vld [vmem:[%s274 + $0x8] sm:$0xff]
      %v284 = vld [vmem:[%s274 + $0x10] sm:$0xff]
      %v285 = vld [vmem:[%s274 + $0x18] sm:$0xff]
      %v286 = vld [vmem:[%s274 + $0x20] sm:$0xff]
      %v287 = vld [vmem:[%s274 + $0x28] sm:$0xff]
      %v288 = vld [vmem:[%s274 + $0x30] sm:$0xff]
      %v289 = vld [vmem:[%s274 + $0x38] sm:$0xff]
      %v290 = vld [vmem:[%s274 + $0x40] sm:$0xff]
      %v291 = vld [vmem:[%s274 + $0x48] sm:$0xff]
      %v292 = vld [vmem:[%s274 + $0x50] sm:$0xff]
      %v293 = vld [vmem:[%s274 + $0x58] sm:$0xff]
      %v294 = vld [vmem:[%s274 + $0x60] sm:$0xff]
      %v295 = vld [vmem:[%s274 + $0x68] sm:$0xff]
      %v296 = vld [vmem:[%s274 + $0x70] sm:$0xff]
      %v297 = vld [vmem:[%s274 + $0x78] sm:$0xff]
      %v298 = vld [vmem:[%s1] sm:$0xff]
      %v299 = vld [vmem:[%s1 + $0x8] sm:$0xff]
      %v300 = vld [vmem:[%s2] sm:$0x1]
      %v302 = vlaneseq
      %v303 = vshrl.u32 %v302, 7
      %v304 = vsub.s32 0, %v303
      %v305 = vrot.slane %v300, %v304
      %vm307 = vcmask 130048
      %v309 = vsel %vm307, %v282, 0
      %v312 = vsel %vm307, %v283, 0
      %v315 = vsel %vm307, %v284, 0
      %v318 = vsel %vm307, %v285, 0
      %v321 = vsel %vm307, %v286, 0
      %v324 = vsel %vm307, %v287, 0
      %v327 = vsel %vm307, %v288, 0
      %v330 = vsel %vm307, %v289, 0
      %v333 = vsel %vm307, %v290, 0
      %v336 = vsel %vm307, %v291, 0
      %v339 = vsel %vm307, %v292, 0
      %v342 = vsel %vm307, %v293, 0
      %v345 = vsel %vm307, %v294, 0
      %v348 = vsel %vm307, %v295, 0
      %v351 = vsel %vm307, %v296, 0
      %v354 = vsel %vm307, %v297, 0
      %356 = vmatprep.subr.mxu0 0.0
      %357 = vmatpush1.msra.mxu0 0.0
      %358 = vmatprep.subr.mxu0 0.0
      %359 = vmatpush1.msra.mxu0 0.0
      %360 = vmatprep.subr.mxu0 0.0
      %361 = vmatpush1.msra.mxu0 0.0
      %362 = vmatprep.subr.mxu0 0.0
      %363 = vmatpush1.msra.mxu0 0.0
      %364 = vmatprep.subr.mxu0 0.0
      %365 = vmatpush1.msra.mxu0 0.0
      %366 = vmatprep.subr.mxu0 0.0
      %367 = vmatpush1.msra.mxu0 0.0
      %368 = vmatprep.subr.mxu0 0.0
      %369 = vmatpush1.msra.mxu0 0.0
      %370 = vmatprep.subr.mxu0 0.0
      %371 = vmatpush1.msra.mxu0 0.0
      %372 = vmatprep.subr.mxu0 0.0
      %373 = vmatpush1.msra.mxu0 0.0
      %374 = vmatprep.subr.mxu0 0.0
      %375 = vmatpush1.msra.mxu0 0.0
      %376 = vmatprep.subr.mxu0 0.0
      %377 = vmatpush1.msra.mxu0 0.0
      %378 = vmatprep.subr.mxu0 0.0
      %379 = vmatpush1.msra.mxu0 0.0
      %380 = vmatprep.subr.mxu0 0.0
      %381 = vmatpush1.msra.mxu0 0.0
      %382 = vmatprep.subr.mxu0 0.0
      %383 = vmatpush1.msra.mxu0 0.0
      %384 = vmatprep.subr.mxu0 0.0
      %385 = vmatpush1.msra.mxu0 %v299
      %386 = vmatprep.subr.mxu0 0.0
      %387 = vmatpush1.msra.mxu0 %v298
      %388 = vmatprep.subr.mxu0 0.0
      %389 = vmatpush2.msra.mxu0 0.0
      %390 = vmatprep.subr.mxu0 0.0
      %391 = vmatpush2.msra.mxu0 0.0
      %392 = vmatprep.subr.mxu0 0.0
      %393 = vmatpush2.msra.mxu0 0.0
      %394 = vmatprep.subr.mxu0 0.0
      %395 = vmatpush2.msra.mxu0 0.0
      %396 = vmatprep.subr.mxu0 0.0
      %397 = vmatpush2.msra.mxu0 0.0
      %398 = vmatprep.subr.mxu0 0.0
      %399 = vmatpush2.msra.mxu0 0.0
      %400 = vmatprep.subr.mxu0 0.0
      %401 = vmatpush2.msra.mxu0 0.0
      %402 = vmatprep.subr.mxu0 0.0
      %403 = vmatpush2.msra.mxu0 0.0
      %404 = vmatprep.subr.mxu0 0.0
      %405 = vmatpush2.msra.mxu0 0.0
      %406 = vmatprep.subr.mxu0 0.0
      %407 = vmatpush2.msra.mxu0 0.0
      %408 = vmatprep.subr.mxu0 0.0
      %409 = vmatpush2.msra.mxu0 0.0
      %410 = vmatprep.subr.mxu0 0.0
      %411 = vmatpush2.msra.mxu0 0.0
      %412 = vmatprep.subr.mxu0 0.0
      %413 = vmatpush2.msra.mxu0 0.0
      %414 = vmatprep.subr.mxu0 0.0
      %415 = vmatpush2.msra.mxu0 0.0
      %416 = vmatprep.subr.mxu0 0.0
      %417 = vmatpush2.msra.mxu0 0.0
      %418 = vmatprep.subr.mxu0 0.0
      %419 = vmatpush2.msra.mxu0 0.0
      %420 = vmatprep.mubr.f32.mxu0 0.0
      %421 = vmatmul.mubr.f32.gmra.mxu0 %v309
      %v422 = vpop.f32.mrf.mxu0
      %v423 = vadd.f32 %v305, %v422
      %v424 = vpop.f32.mrf.mxu0
      %425 = vmatprep.mubr.f32.mxu0 0.0
      %426 = vmatmul.mubr.f32.gmra.mxu0 %v312
      %v427 = vpop.f32.mrf.mxu0
      %v428 = vadd.f32 %v305, %v427
      %v429 = vpop.f32.mrf.mxu0
      %430 = vmatprep.mubr.f32.mxu0 0.0
      %431 = vmatmul.mubr.f32.gmra.mxu0 %v315
      %v432 = vpop.f32.mrf.mxu0
      %v433 = vadd.f32 %v305, %v432
      %v434 = vpop.f32.mrf.mxu0
      %435 = vmatprep.mubr.f32.mxu0 0.0
      %436 = vmatmul.mubr.f32.gmra.mxu0 %v318
      %v437 = vpop.f32.mrf.mxu0
      %v438 = vadd.f32 %v305, %v437
      %v439 = vpop.f32.mrf.mxu0
      %440 = vmatprep.mubr.f32.mxu0 0.0
      %441 = vmatmul.mubr.f32.gmra.mxu0 %v321
      %v442 = vpop.f32.mrf.mxu0
      %v443 = vadd.f32 %v305, %v442
      %v444 = vpop.f32.mrf.mxu0
      %445 = vmatprep.mubr.f32.mxu0 0.0
      %446 = vmatmul.mubr.f32.gmra.mxu0 %v324
      %v447 = vpop.f32.mrf.mxu0
      %v448 = vadd.f32 %v305, %v447
      %v449 = vpop.f32.mrf.mxu0
      %450 = vmatprep.mubr.f32.mxu0 0.0
      %451 = vmatmul.mubr.f32.gmra.mxu0 %v327
      %v452 = vpop.f32.mrf.mxu0
      %v453 = vadd.f32 %v305, %v452
      %v454 = vpop.f32.mrf.mxu0
      %455 = vmatprep.mubr.f32.mxu0 0.0
      %456 = vmatmul.mubr.f32.gmra.mxu0 %v330
      %v457 = vpop.f32.mrf.mxu0
      %v458 = vadd.f32 %v305, %v457
      %v459 = vpop.f32.mrf.mxu0
      %460 = vmatprep.mubr.f32.mxu0 0.0
      %461 = vmatmul.mubr.f32.gmra.mxu0 %v333
      %v462 = vpop.f32.mrf.mxu0
      %v463 = vadd.f32 %v305, %v462
      %v464 = vpop.f32.mrf.mxu0
      %465 = vmatprep.mubr.f32.mxu0 0.0
      %466 = vmatmul.mubr.f32.gmra.mxu0 %v336
      %v467 = vpop.f32.mrf.mxu0
      %v468 = vadd.f32 %v305, %v467
      %v469 = vpop.f32.mrf.mxu0
      %470 = vmatprep.mubr.f32.mxu0 0.0
      %471 = vmatmul.mubr.f32.gmra.mxu0 %v339
      %v472 = vpop.f32.mrf.mxu0
      %v473 = vadd.f32 %v305, %v472
      %v474 = vpop.f32.mrf.mxu0
      %475 = vmatprep.mubr.f32.mxu0 0.0
      %476 = vmatmul.mubr.f32.gmra.mxu0 %v342
      %v477 = vpop.f32.mrf.mxu0
      %v478 = vadd.f32 %v305, %v477
      %v479 = vpop.f32.mrf.mxu0
      %480 = vmatprep.mubr.f32.mxu0 0.0
      %481 = vmatmul.mubr.f32.gmra.mxu0 %v345
      %v482 = vpop.f32.mrf.mxu0
      %v483 = vadd.f32 %v305, %v482
      %v484 = vpop.f32.mrf.mxu0
      %485 = vmatprep.mubr.f32.mxu0 0.0
      %486 = vmatmul.mubr.f32.gmra.mxu0 %v348
      %v487 = vpop.f32.mrf.mxu0
      %v488 = vadd.f32 %v305, %v487
      %v489 = vpop.f32.mrf.mxu0
      %490 = vmatprep.mubr.f32.mxu0 0.0
      %491 = vmatmul.mubr.f32.gmra.mxu0 %v351
      %v492 = vpop.f32.mrf.mxu0
      %v493 = vadd.f32 %v305, %v492
      %v494 = vpop.f32.mrf.mxu0
      %495 = vmatprep.mubr.f32.mxu0 0.0
      %496 = vmatmul.mubr.f32.gmra.mxu0 %v354
      %v497 = vpop.f32.mrf.mxu0
      %v498 = vadd.f32 %v305, %v497
      %v499 = vpop.f32.mrf.mxu0
      %500 = vdwg.mxu0
      %v501 = vmax.f32 %v423, 0.0
      %v502 = vmax.f32 %v428, 0.0
      %v503 = vmax.f32 %v433, 0.0
      %v504 = vmax.f32 %v438, 0.0
      %v505 = vmax.f32 %v443, 0.0
      %v506 = vmax.f32 %v448, 0.0
      %v507 = vmax.f32 %v453, 0.0
      %v508 = vmax.f32 %v458, 0.0
      %v509 = vmax.f32 %v463, 0.0
      %v510 = vmax.f32 %v468, 0.0
      %v511 = vmax.f32 %v473, 0.0
      %v512 = vmax.f32 %v478, 0.0
      %v513 = vmax.f32 %v483, 0.0
      %v514 = vmax.f32 %v488, 0.0
      %v515 = vmax.f32 %v493, 0.0
      %v516 = vmax.f32 %v498, 0.0
      %v517 = vld [vmem:[%s3] sm:$0xff]
      %v518 = vld [vmem:[%s3 + $0x8] sm:$0xff]
      %v519 = vld [vmem:[%s3 + $0x10] sm:$0xff]
      %v520 = vld [vmem:[%s3 + $0x18] sm:$0xff]
      %v521 = vld [vmem:[%s3 + $0x20] sm:$0xff]
      %v522 = vld [vmem:[%s3 + $0x28] sm:$0xff]
      %v523 = vld [vmem:[%s3 + $0x30] sm:$0xff]
      %v524 = vld [vmem:[%s3 + $0x38] sm:$0xff]
      %v525 = vld [vmem:[%s3 + $0x40] sm:$0xff]
      %v526 = vld [vmem:[%s3 + $0x48] sm:$0xff]
      %v527 = vld [vmem:[%s3 + $0x50] sm:$0xff]
      %v528 = vld [vmem:[%s3 + $0x58] sm:$0xff]
      %v529 = vld [vmem:[%s3 + $0x60] sm:$0xff]
      %v530 = vld [vmem:[%s3 + $0x68] sm:$0xff]
      %v531 = vld [vmem:[%s3 + $0x70] sm:$0xff]
      %v532 = vld [vmem:[%s3 + $0x78] sm:$0xff]
      %v533 = vld [vmem:[%s4] sm:$0x1]
      %v535 = vlaneseq
      %v536 = vshrl.u32 %v535, 7
      %v537 = vsub.s32 0, %v536
      %v538 = vrot.slane %v533, %v537
      %540 = vmatprep.subr.mxu0 0.0
      %541 = vmatpush1.msra.mxu0 %v532
      %542 = vmatprep.subr.mxu0 0.0
      %543 = vmatpush1.msra.mxu0 %v531
      %544 = vmatprep.subr.mxu0 0.0
      %545 = vmatpush1.msra.mxu0 %v530
      %546 = vmatprep.subr.mxu0 0.0
      %547 = vmatpush1.msra.mxu0 %v529
      %548 = vmatprep.subr.mxu0 0.0
      %549 = vmatpush1.msra.mxu0 %v528
      %550 = vmatprep.subr.mxu0 0.0
      %551 = vmatpush1.msra.mxu0 %v527
      %552 = vmatprep.subr.mxu0 0.0
      %553 = vmatpush1.msra.mxu0 %v526
      %554 = vmatprep.subr.mxu0 0.0
      %555 = vmatpush1.msra.mxu0 %v525
      %556 = vmatprep.subr.mxu0 0.0
      %557 = vmatpush1.msra.mxu0 %v524
      %558 = vmatprep.subr.mxu0 0.0
      %559 = vmatpush1.msra.mxu0 %v523
      %560 = vmatprep.subr.mxu0 0.0
      %561 = vmatpush1.msra.mxu0 %v522
      %562 = vmatprep.subr.mxu0 0.0
      %563 = vmatpush1.msra.mxu0 %v521
      %564 = vmatprep.subr.mxu0 0.0
      %565 = vmatpush1.msra.mxu0 %v520
      %566 = vmatprep.subr.mxu0 0.0
      %567 = vmatpush1.msra.mxu0 %v519
      %568 = vmatprep.subr.mxu0 0.0
      %569 = vmatpush1.msra.mxu0 %v518
      %570 = vmatprep.subr.mxu0 0.0
      %571 = vmatpush1.msra.mxu0 %v517
      %572 = vmatprep.subr.mxu0 0.0
      %573 = vmatpush2.msra.mxu0 0.0
      %574 = vmatprep.subr.mxu0 0.0
      %575 = vmatpush2.msra.mxu0 0.0
      %576 = vmatprep.subr.mxu0 0.0
      %577 = vmatpush2.msra.mxu0 0.0
      %578 = vmatprep.subr.mxu0 0.0
      %579 = vmatpush2.msra.mxu0 0.0
      %580 = vmatprep.subr.mxu0 0.0
      %581 = vmatpush2.msra.mxu0 0.0
      %582 = vmatprep.subr.mxu0 0.0
      %583 = vmatpush2.msra.mxu0 0.0
      %584 = vmatprep.subr.mxu0 0.0
      %585 = vmatpush2.msra.mxu0 0.0
      %586 = vmatprep.subr.mxu0 0.0
      %587 = vmatpush2.msra.mxu0 0.0
      %588 = vmatprep.subr.mxu0 0.0
      %589 = vmatpush2.msra.mxu0 0.0
      %590 = vmatprep.subr.mxu0 0.0
      %591 = vmatpush2.msra.mxu0 0.0
      %592 = vmatprep.subr.mxu0 0.0
      %593 = vmatpush2.msra.mxu0 0.0
      %594 = vmatprep.subr.mxu0 0.0
      %595 = vmatpush2.msra.mxu0 0.0
      %596 = vmatprep.subr.mxu0 0.0
      %597 = vmatpush2.msra.mxu0 0.0
      %598 = vmatprep.subr.mxu0 0.0
      %599 = vmatpush2.msra.mxu0 0.0
      %600 = vmatprep.subr.mxu0 0.0
      %601 = vmatpush2.msra.mxu0 0.0
      %602 = vmatprep.subr.mxu0 0.0
      %603 = vmatpush2.msra.mxu0 0.0
      %604 = vmatprep.mubr.f32.mxu0 0.0
      %605 = vmatmul.mubr.f32.gmra.mxu0 %v501
      %v606 = vpop.f32.mrf.mxu0
      %v607 = vadd.f32 %v538, %v606
      %v608 = vpop.f32.mrf.mxu0
      %609 = vmatprep.mubr.f32.mxu0 0.0
      %610 = vmatmul.mubr.f32.gmra.mxu0 %v502
      %v611 = vpop.f32.mrf.mxu0
      %v612 = vadd.f32 %v538, %v611
      %v613 = vpop.f32.mrf.mxu0
      %614 = vmatprep.mubr.f32.mxu0 0.0
      %615 = vmatmul.mubr.f32.gmra.mxu0 %v503
      %v616 = vpop.f32.mrf.mxu0
      %v617 = vadd.f32 %v538, %v616
      %v618 = vpop.f32.mrf.mxu0
      %619 = vmatprep.mubr.f32.mxu0 0.0
      %620 = vmatmul.mubr.f32.gmra.mxu0 %v504
      %v621 = vpop.f32.mrf.mxu0
      %v622 = vadd.f32 %v538, %v621
      %v623 = vpop.f32.mrf.mxu0
      %624 = vmatprep.mubr.f32.mxu0 0.0
      %625 = vmatmul.mubr.f32.gmra.mxu0 %v505
      %v626 = vpop.f32.mrf.mxu0
      %v627 = vadd.f32 %v538, %v626
      %v628 = vpop.f32.mrf.mxu0
      %629 = vmatprep.mubr.f32.mxu0 0.0
      %630 = vmatmul.mubr.f32.gmra.mxu0 %v506
      %v631 = vpop.f32.mrf.mxu0
      %v632 = vadd.f32 %v538, %v631
      %v633 = vpop.f32.mrf.mxu0
      %634 = vmatprep.mubr.f32.mxu0 0.0
      %635 = vmatmul.mubr.f32.gmra.mxu0 %v507
      %v636 = vpop.f32.mrf.mxu0
      %v637 = vadd.f32 %v538, %v636
      %v638 = vpop.f32.mrf.mxu0
      %639 = vmatprep.mubr.f32.mxu0 0.0
      %640 = vmatmul.mubr.f32.gmra.mxu0 %v508
      %v641 = vpop.f32.mrf.mxu0
      %v642 = vadd.f32 %v538, %v641
      %v643 = vpop.f32.mrf.mxu0
      %644 = vmatprep.mubr.f32.mxu0 0.0
      %645 = vmatmul.mubr.f32.gmra.mxu0 %v509
      %v646 = vpop.f32.mrf.mxu0
      %v647 = vadd.f32 %v538, %v646
      %v648 = vpop.f32.mrf.mxu0
      %649 = vmatprep.mubr.f32.mxu0 0.0
      %650 = vmatmul.mubr.f32.gmra.mxu0 %v510
      %v651 = vpop.f32.mrf.mxu0
      %v652 = vadd.f32 %v538, %v651
      %v653 = vpop.f32.mrf.mxu0
      %654 = vmatprep.mubr.f32.mxu0 0.0
      %655 = vmatmul.mubr.f32.gmra.mxu0 %v511
      %v656 = vpop.f32.mrf.mxu0
      %v657 = vadd.f32 %v538, %v656
      %v658 = vpop.f32.mrf.mxu0
      %659 = vmatprep.mubr.f32.mxu0 0.0
      %660 = vmatmul.mubr.f32.gmra.mxu0 %v512
      %v661 = vpop.f32.mrf.mxu0
      %v662 = vadd.f32 %v538, %v661
      %v663 = vpop.f32.mrf.mxu0
      %664 = vmatprep.mubr.f32.mxu0 0.0
      %665 = vmatmul.mubr.f32.gmra.mxu0 %v513
      %v666 = vpop.f32.mrf.mxu0
      %v667 = vadd.f32 %v538, %v666
      %v668 = vpop.f32.mrf.mxu0
      %669 = vmatprep.mubr.f32.mxu0 0.0
      %670 = vmatmul.mubr.f32.gmra.mxu0 %v514
      %v671 = vpop.f32.mrf.mxu0
      %v672 = vadd.f32 %v538, %v671
      %v673 = vpop.f32.mrf.mxu0
      %674 = vmatprep.mubr.f32.mxu0 0.0
      %675 = vmatmul.mubr.f32.gmra.mxu0 %v515
      %v676 = vpop.f32.mrf.mxu0
      %v677 = vadd.f32 %v538, %v676
      %v678 = vpop.f32.mrf.mxu0
      %679 = vmatprep.mubr.f32.mxu0 0.0
      %680 = vmatmul.mubr.f32.gmra.mxu0 %v516
      %v681 = vpop.f32.mrf.mxu0
      %v682 = vadd.f32 %v538, %v681
      %v683 = vpop.f32.mrf.mxu0
      %684 = vdwg.mxu0
      %v685 = vmax.f32 %v607, 0.0
      %v686 = vmax.f32 %v612, 0.0
      %v687 = vmax.f32 %v617, 0.0
      %v688 = vmax.f32 %v622, 0.0
      %v689 = vmax.f32 %v627, 0.0
      %v690 = vmax.f32 %v632, 0.0
      %v691 = vmax.f32 %v637, 0.0
      %v692 = vmax.f32 %v642, 0.0
      %v693 = vmax.f32 %v647, 0.0
      %v694 = vmax.f32 %v652, 0.0
      %v695 = vmax.f32 %v657, 0.0
      %v696 = vmax.f32 %v662, 0.0
      %v697 = vmax.f32 %v667, 0.0
      %v698 = vmax.f32 %v672, 0.0
      %v699 = vmax.f32 %v677, 0.0
      %v700 = vmax.f32 %v682, 0.0
      %v701 = vld [vmem:[%s5] sm:$0xff]
      %v702 = vld [vmem:[%s5 + $0x8] sm:$0xff]
      %v703 = vld [vmem:[%s5 + $0x10] sm:$0xff]
      %v704 = vld [vmem:[%s5 + $0x18] sm:$0xff]
      %v705 = vld [vmem:[%s5 + $0x20] sm:$0xff]
      %v706 = vld [vmem:[%s5 + $0x28] sm:$0xff]
      %v707 = vld [vmem:[%s5 + $0x30] sm:$0xff]
      %v708 = vld [vmem:[%s5 + $0x38] sm:$0xff]
      %v709 = vld [vmem:[%s5 + $0x40] sm:$0xff]
      %v710 = vld [vmem:[%s5 + $0x48] sm:$0xff]
      %v711 = vld [vmem:[%s5 + $0x50] sm:$0xff]
      %v712 = vld [vmem:[%s5 + $0x58] sm:$0xff]
      %v713 = vld [vmem:[%s5 + $0x60] sm:$0xff]
      %v714 = vld [vmem:[%s5 + $0x68] sm:$0xff]
      %v715 = vld [vmem:[%s5 + $0x70] sm:$0xff]
      %v716 = vld [vmem:[%s5 + $0x78] sm:$0xff]
      %v717 = vld [vmem:[%s6] sm:$0x1]
      %v719 = vlaneseq
      %v720 = vshrl.u32 %v719, 7
      %v721 = vsub.s32 0, %v720
      %v722 = vrot.slane %v717, %v721
      %724 = vmatprep.subr.mxu0 0.0
      %725 = vmatpush1.msra.mxu0 %v716
      %726 = vmatprep.subr.mxu0 0.0
      %727 = vmatpush1.msra.mxu0 %v715
      %728 = vmatprep.subr.mxu0 0.0
      %729 = vmatpush1.msra.mxu0 %v714
      %730 = vmatprep.subr.mxu0 0.0
      %731 = vmatpush1.msra.mxu0 %v713
      %732 = vmatprep.subr.mxu0 0.0
      %733 = vmatpush1.msra.mxu0 %v712
      %734 = vmatprep.subr.mxu0 0.0
      %735 = vmatpush1.msra.mxu0 %v711
      %736 = vmatprep.subr.mxu0 0.0
      %737 = vmatpush1.msra.mxu0 %v710
      %738 = vmatprep.subr.mxu0 0.0
      %739 = vmatpush1.msra.mxu0 %v709
      %740 = vmatprep.subr.mxu0 0.0
      %741 = vmatpush1.msra.mxu0 %v708
      %742 = vmatprep.subr.mxu0 0.0
      %743 = vmatpush1.msra.mxu0 %v707
      %744 = vmatprep.subr.mxu0 0.0
      %745 = vmatpush1.msra.mxu0 %v706
      %746 = vmatprep.subr.mxu0 0.0
      %747 = vmatpush1.msra.mxu0 %v705
      %748 = vmatprep.subr.mxu0 0.0
      %749 = vmatpush1.msra.mxu0 %v704
      %750 = vmatprep.subr.mxu0 0.0
      %751 = vmatpush1.msra.mxu0 %v703
      %752 = vmatprep.subr.mxu0 0.0
      %753 = vmatpush1.msra.mxu0 %v702
      %754 = vmatprep.subr.mxu0 0.0
      %755 = vmatpush1.msra.mxu0 %v701
      %756 = vmatprep.subr.mxu0 0.0
      %757 = vmatpush2.msra.mxu0 0.0
      %758 = vmatprep.subr.mxu0 0.0
      %759 = vmatpush2.msra.mxu0 0.0
      %760 = vmatprep.subr.mxu0 0.0
      %761 = vmatpush2.msra.mxu0 0.0
      %762 = vmatprep.subr.mxu0 0.0
      %763 = vmatpush2.msra.mxu0 0.0
      %764 = vmatprep.subr.mxu0 0.0
      %765 = vmatpush2.msra.mxu0 0.0
      %766 = vmatprep.subr.mxu0 0.0
      %767 = vmatpush2.msra.mxu0 0.0
      %768 = vmatprep.subr.mxu0 0.0
      %769 = vmatpush2.msra.mxu0 0.0
      %770 = vmatprep.subr.mxu0 0.0
      %771 = vmatpush2.msra.mxu0 0.0
      %772 = vmatprep.subr.mxu0 0.0
      %773 = vmatpush2.msra.mxu0 0.0
      %774 = vmatprep.subr.mxu0 0.0
      %775 = vmatpush2.msra.mxu0 0.0
      %776 = vmatprep.subr.mxu0 0.0
      %777 = vmatpush2.msra.mxu0 0.0
      %778 = vmatprep.subr.mxu0 0.0
      %779 = vmatpush2.msra.mxu0 0.0
      %780 = vmatprep.subr.mxu0 0.0
      %781 = vmatpush2.msra.mxu0 0.0
      %782 = vmatprep.subr.mxu0 0.0
      %783 = vmatpush2.msra.mxu0 0.0
      %784 = vmatprep.subr.mxu0 0.0
      %785 = vmatpush2.msra.mxu0 0.0
      %786 = vmatprep.subr.mxu0 0.0
      %787 = vmatpush2.msra.mxu0 0.0
      %788 = vmatprep.mubr.f32.mxu0 0.0
      %789 = vmatmul.mubr.f32.gmra.mxu0 %v685
      %v790 = vpop.f32.mrf.mxu0
      %v791 = vadd.f32 %v722, %v790
      %v792 = vpop.f32.mrf.mxu0
      %793 = vmatprep.mubr.f32.mxu0 0.0
      %794 = vmatmul.mubr.f32.gmra.mxu0 %v686
      %v795 = vpop.f32.mrf.mxu0
      %v796 = vadd.f32 %v722, %v795
      %v797 = vpop.f32.mrf.mxu0
      %798 = vmatprep.mubr.f32.mxu0 0.0
      %799 = vmatmul.mubr.f32.gmra.mxu0 %v687
      %v800 = vpop.f32.mrf.mxu0
      %v801 = vadd.f32 %v722, %v800
      %v802 = vpop.f32.mrf.mxu0
      %803 = vmatprep.mubr.f32.mxu0 0.0
      %804 = vmatmul.mubr.f32.gmra.mxu0 %v688
      %v805 = vpop.f32.mrf.mxu0
      %v806 = vadd.f32 %v722, %v805
      %v807 = vpop.f32.mrf.mxu0
      %808 = vmatprep.mubr.f32.mxu0 0.0
      %809 = vmatmul.mubr.f32.gmra.mxu0 %v689
      %v810 = vpop.f32.mrf.mxu0
      %v811 = vadd.f32 %v722, %v810
      %v812 = vpop.f32.mrf.mxu0
      %813 = vmatprep.mubr.f32.mxu0 0.0
      %814 = vmatmul.mubr.f32.gmra.mxu0 %v690
      %v815 = vpop.f32.mrf.mxu0
      %v816 = vadd.f32 %v722, %v815
      %v817 = vpop.f32.mrf.mxu0
      %818 = vmatprep.mubr.f32.mxu0 0.0
      %819 = vmatmul.mubr.f32.gmra.mxu0 %v691
      %v820 = vpop.f32.mrf.mxu0
      %v821 = vadd.f32 %v722, %v820
      %v822 = vpop.f32.mrf.mxu0
      %823 = vmatprep.mubr.f32.mxu0 0.0
      %824 = vmatmul.mubr.f32.gmra.mxu0 %v692
      %v825 = vpop.f32.mrf.mxu0
      %v826 = vadd.f32 %v722, %v825
      %v827 = vpop.f32.mrf.mxu0
      %828 = vmatprep.mubr.f32.mxu0 0.0
      %829 = vmatmul.mubr.f32.gmra.mxu0 %v693
      %v830 = vpop.f32.mrf.mxu0
      %v831 = vadd.f32 %v722, %v830
      %v832 = vpop.f32.mrf.mxu0
      %833 = vmatprep.mubr.f32.mxu0 0.0
      %834 = vmatmul.mubr.f32.gmra.mxu0 %v694
      %v835 = vpop.f32.mrf.mxu0
      %v836 = vadd.f32 %v722, %v835
      %v837 = vpop.f32.mrf.mxu0
      %838 = vmatprep.mubr.f32.mxu0 0.0
      %839 = vmatmul.mubr.f32.gmra.mxu0 %v695
      %v840 = vpop.f32.mrf.mxu0
      %v841 = vadd.f32 %v722, %v840
      %v842 = vpop.f32.mrf.mxu0
      %843 = vmatprep.mubr.f32.mxu0 0.0
      %844 = vmatmul.mubr.f32.gmra.mxu0 %v696
      %v845 = vpop.f32.mrf.mxu0
      %v846 = vadd.f32 %v722, %v845
      %v847 = vpop.f32.mrf.mxu0
      %848 = vmatprep.mubr.f32.mxu0 0.0
      %849 = vmatmul.mubr.f32.gmra.mxu0 %v697
      %v850 = vpop.f32.mrf.mxu0
      %v851 = vadd.f32 %v722, %v850
      %v852 = vpop.f32.mrf.mxu0
      %853 = vmatprep.mubr.f32.mxu0 0.0
      %854 = vmatmul.mubr.f32.gmra.mxu0 %v698
      %v855 = vpop.f32.mrf.mxu0
      %v856 = vadd.f32 %v722, %v855
      %v857 = vpop.f32.mrf.mxu0
      %858 = vmatprep.mubr.f32.mxu0 0.0
      %859 = vmatmul.mubr.f32.gmra.mxu0 %v699
      %v860 = vpop.f32.mrf.mxu0
      %v861 = vadd.f32 %v722, %v860
      %v862 = vpop.f32.mrf.mxu0
      %863 = vmatprep.mubr.f32.mxu0 0.0
      %864 = vmatmul.mubr.f32.gmra.mxu0 %v700
      %v865 = vpop.f32.mrf.mxu0
      %v866 = vadd.f32 %v722, %v865
      %v867 = vpop.f32.mrf.mxu0
      %868 = vdwg.mxu0
      %vm869 = vcmask 31744
      %870 = vst.msk [vmem:[%s280] sm:$0xff] %vm869, %v791
      %871 = vst.msk [vmem:[%s280 + $0x8] sm:$0xff] %vm869, %v796
      %872 = vst.msk [vmem:[%s280 + $0x10] sm:$0xff] %vm869, %v801
      %873 = vst.msk [vmem:[%s280 + $0x18] sm:$0xff] %vm869, %v806
      %874 = vst.msk [vmem:[%s280 + $0x20] sm:$0xff] %vm869, %v811
      %875 = vst.msk [vmem:[%s280 + $0x28] sm:$0xff] %vm869, %v816
      %876 = vst.msk [vmem:[%s280 + $0x30] sm:$0xff] %vm869, %v821
      %877 = vst.msk [vmem:[%s280 + $0x38] sm:$0xff] %vm869, %v826
      %878 = vst.msk [vmem:[%s280 + $0x40] sm:$0xff] %vm869, %v831
      %879 = vst.msk [vmem:[%s280 + $0x48] sm:$0xff] %vm869, %v836
      %880 = vst.msk [vmem:[%s280 + $0x50] sm:$0xff] %vm869, %v841
      %881 = vst.msk [vmem:[%s280 + $0x58] sm:$0xff] %vm869, %v846
      %882 = vst.msk [vmem:[%s280 + $0x60] sm:$0xff] %vm869, %v851
      %883 = vst.msk [vmem:[%s280 + $0x68] sm:$0xff] %vm869, %v856
      %884 = vst.msk [vmem:[%s280 + $0x70] sm:$0xff] %vm869, %v861
      %885 = vst.msk [vmem:[%s280 + $0x78] sm:$0xff] %vm869, %v866
      %s886 = smul.u32 16, %s18
      %p887 = scmp.lt.s32.totalorder %s886, 31
      %s888 = scalar_select %p887, %s886, 31
      %s889 = smul.addr %s888, 8
      %s890 = scalar_lea.vmem %s7, %s889
      // Predicated region
      $region49: #{tpu_custom_call.1} parent=47 // pred_check
        %p891 = pneg %p188
      $region50: #{tpu_custom_call.1} parent=47 // pred_check_branch
        %893 = sbr.rel (%p891) target = $region52
      $region51: #{tpu_custom_call.1} parent=47 // pred_region
        %s894 = smul.u32 16, %s18
      $region52: #{tpu_custom_call.1} parent=47 // pred_fallthru
        _
    $region48: #{tpu_custom_call.1} parent=5 // pred_fallthru
      _
    %p895 = scmp.le.s32.totalorder 2, %s13
    // Predicated region
    $region53: #{tpu_custom_call.1} parent=5 // pred_check
      %p896 = pneg %p895
    $region54: #{tpu_custom_call.1} parent=5 // pred_check_branch
      %898 = sbr.rel (%p896) target = $region56
    $region55: #{tpu_custom_call.1} parent=5 // pred_region
      %s899 = ssub.s32 %s13, 2
      // Predicated region
      $region57: #{tpu_custom_call.1} parent=55 // pred_check
        %p900 = pneg %p194
      $region58: #{tpu_custom_call.1} parent=55 // pred_check_branch
        %902 = sbr.rel (%p900) target = $region60
      $region59: #{tpu_custom_call.1} parent=55 // pred_region
        %s903 = smul.u32 16, %s19
        %p904 = scmp.lt.s32.totalorder %s903, 31
        %s905 = scalar_select %p904, %s903, 31
        %s906 = smul.addr %s905, 8
        %s907 = scalar_lea.vmem %s7, %s906
      $region60: #{tpu_custom_call.1} parent=55 // pred_fallthru
        _
    $region56: #{tpu_custom_call.1} parent=5 // pred_fallthru
      _
  $region6: #{tpu_custom_call.1} parent=0 // loop_footer
    %s17 = sadd.s32 1, %s13
  $region7: #{tpu_custom_call.1} parent=0 // loop_footer_branch
    %12 = sbr.rel target = $region3
  $region8: #{tpu_custom_call.1} parent=0 // loop_exit
    _

</llo_original>
